<compile_context>
chip_gen: v7x
topology: tpu7x:2x2x1
jax: 0.10.0
libtpu: 0.0.40
codegen_flags: <defaults>
</compile_context>

<pallas_src>
import math

import jax
import jax.numpy as jnp
from jax.experimental import pallas as pl
from jax.experimental.pallas import tpu as pltpu


# ---------------------------------------------------------------------------
# Pallas kernel (closure factory so static tiling params are trace-time)
# ---------------------------------------------------------------------------
def _make_vid_kernel(P, tile_p, need_mask, compute_dtype):
    n_chunks = tile_p // 128 if tile_p > 128 else 1

    def kernel(x_ref, t_ref, w1_ref, w2_ref, w3_ref, out_ref):
        j = pl.program_id(1)

        @pl.when(j == 0)
        def _init():
            out_ref[...] = jnp.zeros_like(out_ref)

        x = x_ref[0]     # (Cin, TP): channels on sublanes, positions on lanes
        tt = t_ref[0]    # (Ct,  TP)

        if need_mask:
            # Zero out positions past the true extent P (ragged last tile).
            pos = j * tile_p + jax.lax.broadcasted_iota(jnp.int32, (1, tile_p), 1)
            valid = pos < P
            x = jnp.where(valid, x, jnp.zeros((), dtype=x.dtype))
            tt = jnp.where(valid, tt, jnp.zeros((), dtype=tt.dtype))

        # conv1x1 chain as channel-contraction matmuls on the MXU; f32 accum.
        h = jnp.dot(w1_ref[...], x, preferred_element_type=jnp.float32)
        h = jnp.maximum(h, 0.0).astype(compute_dtype)
        h = jnp.dot(w2_ref[...], h, preferred_element_type=jnp.float32)
        h = jnp.maximum(h, 0.0).astype(compute_dtype)
        pred = jnp.dot(w3_ref[...], h, preferred_element_type=jnp.float32)

        diff = pred - tt.astype(jnp.float32)          # (Ct, TP) f32
        contrib = diff * diff                         # per-channel squared err

        # Fold the position axis down to <=128 lane partials with full-vreg
        # VPU adds (same adds a full reduce would need, but no XLU / masked
        # store per step).  Final lane reduce happens once in the wrapper.
        if tile_p > 128:
            part = contrib[:, 0:128]
            for k in range(1, n_chunks):
                part = part + contrib[:, k * 128:(k + 1) * 128]
        else:
            part = contrib

        out_ref[...] = out_ref[...] + part[None]

    return kernel


def _pick_tile_p(P, Cin, Cmid, Ct, itemsize,
                 budget_bytes=8 << 20, max_tile=8192):
    """Budget the position tile from VMEM, (8,128)-padding aware.

    Counts the double-buffered x+t input blocks plus the live f32
    intermediates (h, pred, contrib).  Clamped to [128, max_tile] and a
    multiple of 128; max_tile also bounds the unrolled lane-fold loop."""
    pad8 = lambda c: ((c + 7) // 8) * 8
    per_pos = (2 * itemsize * (pad8(Cin) + pad8(Ct))          # x, t (x2 bufs)
               + 4 * (2 * pad8(Cmid) + 2 * pad8(Ct)))         # h, h2, pred, contrib
    tile = budget_bytes // max(per_pos, 1)
    tile = max(128, min(tile, max_tile))
    tile = (tile // 128) * 128
    if P <= 128:
        return P                                   # single full-extent block
    return min(tile, ((P + 127) // 128) * 128)


def _vid_partial_sums(x, t, w1, w2, w3):
    """x: (B, Cin, P), t: (B, Ct, P).  Returns (B, Ct, L) per-batch,
    per-channel lane-partials of (pred - t)^2 with
    pred = w3 @ relu(w2 @ relu(w1 @ x))."""
    B, Cin, P = x.shape
    Ct = t.shape[1]
    Cmid = w1.shape[0]
    itemsize = jnp.dtype(x.dtype).itemsize
    compute_dtype = jnp.promote_types(x.dtype, w1.dtype)

    tile_p = _pick_tile_p(P, Cin, Cmid, Ct, itemsize)
    L = min(tile_p, 128)
    num_p_tiles = pl.cdiv(P, tile_p)
    need_mask = (P % tile_p) != 0

    kernel = _make_vid_kernel(P, tile_p, need_mask, compute_dtype)

    flops = 2 * B * P * (Cin * Cmid + Cmid * Cmid + Cmid * Ct) + 3 * B * P * Ct
    bytes_accessed = (x.size * itemsize + t.size * jnp.dtype(t.dtype).itemsize
                      + (w1.size + w2.size + w3.size) * jnp.dtype(w1.dtype).itemsize
                      + B * Ct * L * 4)

    # TODO(synk): on v7x with very wide regressors (Cmid >= ~1024), single-
    # buffer the resident weight blocks (pipeline_mode=pl.Buffered(1)) or add
    # a K grid axis; at these sizes default buffering is cheap.
    return pl.pallas_call(
        kernel,
        out_shape=jax.ShapeDtypeStruct((B, Ct, L), jnp.float32),
        grid_spec=pltpu.PrefetchScalarGridSpec(
            num_scalar_prefetch=0,
            grid=(B, num_p_tiles),
            in_specs=[
                pl.BlockSpec((1, Cin, tile_p), lambda b, j: (b, 0, j)),
                pl.BlockSpec((1, Ct, tile_p), lambda b, j: (b, 0, j)),
                # Weights: constant block index -> resident, no re-DMA.
                pl.BlockSpec((Cmid, Cin), lambda b, j: (0, 0)),
                pl.BlockSpec((Cmid, Cmid), lambda b, j: (0, 0)),
                pl.BlockSpec((Ct, Cmid), lambda b, j: (0, 0)),
            ],
            # Constant over the position axis -> resident accumulator,
            # written back once per batch index.
            out_specs=pl.BlockSpec((1, Ct, L), lambda b, j: (b, 0, 0)),
        ),
        compiler_params=pltpu.CompilerParams(
            dimension_semantics=("parallel", "arbitrary"),
            vmem_limit_bytes=32 * 1024 * 1024),
        cost_estimate=pl.CostEstimate(
            flops=int(flops), transcendentals=0,
            bytes_accessed=int(bytes_accessed)),
    )(x, t, w1, w2, w3)


# ---------------------------------------------------------------------------
# Glue (plain JAX): adaptive pooling, softplus, final reduction
# ---------------------------------------------------------------------------
def _adaptive_avg_pool_nchw(x, out_h, out_w):
    """Matches torch.nn.functional.adaptive_avg_pool2d (incl. non-divisible)."""
    B, C, H, W = x.shape
    if H == out_h and W == out_w:
        return x
    if H % out_h == 0 and W % out_w == 0:
        kh, kw = H // out_h, W // out_w
        return x.reshape(B, C, out_h, kh, out_w, kw).mean(axis=(3, 5))

    def pool_axis(v, size, out, axis):
        starts = [(i * size) // out for i in range(out)]
        ends = [-(-((i + 1) * size) // out) for i in range(out)]
        cs = jnp.cumsum(v, axis=axis)
        zshape = list(v.shape)
        zshape[axis] = 1
        cs = jnp.concatenate([jnp.zeros(zshape, v.dtype), cs], axis=axis)
        hi = jnp.take(cs, jnp.array(ends), axis=axis)
        lo = jnp.take(cs, jnp.array(starts), axis=axis)
        counts = jnp.array([e - s for s, e in zip(starts, ends)], dtype=v.dtype)
        cshape = [1] * v.ndim
        cshape[axis] = out
        return (hi - lo) / counts.reshape(cshape)

    x = pool_axis(x, H, out_h, axis=2)
    x = pool_axis(x, W, out_w, axis=3)
    return x


def vid_loss(s, t, w1, w2, w3, log_scale, eps=1e-5):
    """Equivalent of VIDLoss.forward.

    Regressor conv1x1 weights are passed in their native nn.Conv2d layout
    (out_channels, in_channels): w1 (Cmid, Cin), w2 (Cmid, Cmid), w3 (Ct, Cmid).
    """
    s_H, t_H = s.shape[2], t.shape[2]
    if s_H > t_H:
        s = _adaptive_avg_pool_nchw(s, t_H, t_H)
    elif s_H < t_H:
        t = _adaptive_avg_pool_nchw(t, s_H, s_H)

    B, Cin, H, W = s.shape
    Ct = t.shape[1]
    P = H * W

    # Channels-major, contiguous reshapes only (no transpose, native dtype).
    x = s.reshape(B, Cin, P)
    y = t.reshape(B, Ct, P)

    pred_var = jax.nn.softplus(log_scale.astype(jnp.float32)) + eps      # (Ct,)

    partials = _vid_partial_sums(x, y, w1, w2, w3)        # (B, Ct, L) f32
    per_channel = jnp.sum(partials, axis=(0, 2))          # (Ct,)

    data_term = 0.5 * jnp.sum(per_channel / pred_var) / (B * Ct * P)
    # log(pred_var) is constant over batch/positions -> its full mean equals
    # its channel mean; hoisted out of the kernel.
    var_term = 0.5 * jnp.mean(jnp.log(pred_var))
    return data_term + var_term


# ---------------------------------------------------------------------------
# Pure-JAX reference (mirrors the PyTorch module) for a silent sanity check
# ---------------------------------------------------------------------------
def _ref_vid_loss(s, t, w1, w2, w3, log_scale, eps=1e-5):
    s_H, t_H = s.shape[2], t.shape[2]
    if s_H > t_H:
        s = _adaptive_avg_pool_nchw(s, t_H, t_H)
    elif s_H < t_H:
        t = _adaptive_avg_pool_nchw(t, s_H, s_H)
    B, Cin, H, W = s.shape
    Ct = t.shape[1]
    x = s.reshape(B, Cin, -1).astype(jnp.float32)
    y = t.reshape(B, Ct, -1).astype(jnp.float32)
    hp = jax.lax.Precision.HIGHEST
    h = jnp.maximum(jnp.einsum("oi,bip->bop", w1, x, precision=hp), 0.0)
    h = jnp.maximum(jnp.einsum("oi,bip->bop", w2, h, precision=hp), 0.0)
    pred = jnp.einsum("oi,bip->bop", w3, h, precision=hp)
    pred_var = jax.nn.softplus(log_scale.astype(jnp.float32)) + eps
    pv = pred_var.reshape(1, Ct, 1)
    neg_log_prob = 0.5 * ((pred - y) ** 2 / pv + jnp.log(pv))
    return jnp.mean(neg_log_prob)


if __name__ == "__main__":
    key = jax.random.PRNGKey(0)
    ks = jax.random.split(key, 5)

    # Student / teacher feature maps (NCHW).  s is 16x16 and t is 8x8, so the
    # adaptive-pool matching path is exercised (16x16 -> 8x8).
    B, Cin, Cmid, Ct = 2, 4, 16, 8
    s = jax.random.normal(ks[0], (B, Cin, 16, 16), dtype=jnp.float32)
    t = jax.random.normal(ks[1], (B, Ct, 8, 8), dtype=jnp.float32)

    # Regressor conv1x1 weights in native nn.Conv2d (out, in) layout.
    w1 = jax.random.normal(ks[2], (Cmid, Cin), dtype=jnp.float32) * 0.1
    w2 = jax.random.normal(ks[3], (Cmid, Cmid), dtype=jnp.float32) * 0.1
    w3 = jax.random.normal(ks[4], (Ct, Cmid), dtype=jnp.float32) * 0.1

    init_pred_var, eps = 5.0, 1e-5
    log_scale = jnp.full(
        (Ct,), math.log(math.exp(init_pred_var - eps) - 1.0), dtype=jnp.float32)

    loss = vid_loss(s, t, w1, w2, w3, log_scale, eps=eps)
    loss = jax.block_until_ready(loss)

    ref = _ref_vid_loss(s, t, w1, w2, w3, log_scale, eps=eps)
    assert jnp.allclose(loss, ref, rtol=1e-4, atol=1e-6), (loss, ref)

    print("KERNEL_OK")
</pallas_src>

<mosaic_0001>
module attributes {stable_mosaic.version = 11 : i64} {
  func.func @kernel(%arg0: i32, %arg1: i32, %arg2: memref<1x4x64xf32, #tpu.memory_space<vmem>>, %arg3: memref<1x8x64xf32, #tpu.memory_space<vmem>>, %arg4: memref<16x4xf32, #tpu.memory_space<vmem>>, %arg5: memref<16x16xf32, #tpu.memory_space<vmem>>, %arg6: memref<8x16xf32, #tpu.memory_space<vmem>>, %arg7: memref<1x8x64xf32, #tpu.memory_space<vmem>>) attributes {dimension_semantics = [#tpu.dimension_semantics<parallel>, #tpu.dimension_semantics<arbitrary>], iteration_bounds = array<i64: 2, 1>, scalar_prefetch = 0 : i64, scratch_operands = 0 : i64, tpu.core_type = #tpu.core_type<tc>, window_params = [{transform_indices = @transform_0, window_bounds = array<i64: 1, 4, 64>}, {transform_indices = @transform_1, window_bounds = array<i64: 1, 8, 64>}, {pipeline_mode = #tpu.pipeline_mode<synchronous>, transform_indices = @transform_2, window_bounds = array<i64: 16, 4>}, {pipeline_mode = #tpu.pipeline_mode<synchronous>, transform_indices = @transform_3, window_bounds = array<i64: 16, 16>}, {pipeline_mode = #tpu.pipeline_mode<synchronous>, transform_indices = @transform_4, window_bounds = array<i64: 8, 16>}, {transform_indices = @transform_5, window_bounds = array<i64: 1, 8, 64>}]} {
    %c0_i32 = arith.constant 0 : i32
    %0 = arith.cmpi eq, %arg1, %c0_i32 : i32
    %1 = arith.extui %0 : i1 to i32
    %c0_i32_0 = arith.constant 0 : i32
    %2 = arith.cmpi ne, %1, %c0_i32_0 : i32
    scf.if %2 {
      %cst_22 = arith.constant 0.000000e+00 : f32
      %23 = vector.broadcast %cst_22 : f32 to vector<1x8x64xf32>
      %c0_23 = arith.constant 0 : index
      %c0_24 = arith.constant 0 : index
      %c0_25 = arith.constant 0 : index
      %24 = vector.load %arg7[%c0_23, %c0_24, %c0_25] : memref<1x8x64xf32, #tpu.memory_space<vmem>>, vector<1x8x64xf32>
      tpu.vector_store %arg7[%c0_23, %c0_24, %c0_25], %23 {strides = array<i32>} : memref<1x8x64xf32, #tpu.memory_space<vmem>>, vector<1x8x64xf32>,
    } else {
    }
    %c0 = arith.constant 0 : index
    %c0_1 = arith.constant 0 : index
    %c0_2 = arith.constant 0 : index
    %3 = vector.load %arg2[%c0, %c0_1, %c0_2] : memref<1x4x64xf32, #tpu.memory_space<vmem>>, vector<1x4x64xf32>
    %4 = vector.shape_cast %3 : vector<1x4x64xf32> to vector<4x64xf32>
    %c0_3 = arith.constant 0 : index
    %c0_4 = arith.constant 0 : index
    %c0_5 = arith.constant 0 : index
    %5 = vector.load %arg3[%c0_3, %c0_4, %c0_5] : memref<1x8x64xf32, #tpu.memory_space<vmem>>, vector<1x8x64xf32>
    %6 = vector.shape_cast %5 : vector<1x8x64xf32> to vector<8x64xf32>
    %c0_6 = arith.constant 0 : index
    %c0_7 = arith.constant 0 : index
    %7 = vector.load %arg4[%c0_6, %c0_7] : memref<16x4xf32, #tpu.memory_space<vmem>>, vector<16x4xf32>
    %cst = arith.constant dense<0.000000e+00> : vector<16x64xf32>
    %8 = tpu.matmul %7, %4, %cst {dimension_numbers = #tpu.dot_dimension_numbers<[1], [0], [0], [1], [0, 0, 1, 1], [], []>} : vector<16x4xf32>, vector<4x64xf32>, vector<16x64xf32> -> vector<16x64xf32>
    %cst_8 = arith.constant 0.000000e+00 : f32
    %9 = vector.broadcast %cst_8 : f32 to vector<16x64xf32>
    %10 = arith.maximumf %8, %9 : vector<16x64xf32>
    %c0_9 = arith.constant 0 : index
    %c0_10 = arith.constant 0 : index
    %11 = vector.load %arg5[%c0_9, %c0_10] : memref<16x16xf32, #tpu.memory_space<vmem>>, vector<16x16xf32>
    %cst_11 = arith.constant dense<0.000000e+00> : vector<16x64xf32>
    %12 = tpu.matmul %11, %10, %cst_11 {dimension_numbers = #tpu.dot_dimension_numbers<[1], [0], [0], [1], [0, 0, 1, 1], [], []>} : vector<16x16xf32>, vector<16x64xf32>, vector<16x64xf32> -> vector<16x64xf32>
    %cst_12 = arith.constant 0.000000e+00 : f32
    %13 = vector.broadcast %cst_12 : f32 to vector<16x64xf32>
    %14 = arith.maximumf %12, %13 : vector<16x64xf32>
    %c0_13 = arith.constant 0 : index
    %c0_14 = arith.constant 0 : index
    %15 = vector.load %arg6[%c0_13, %c0_14] : memref<8x16xf32, #tpu.memory_space<vmem>>, vector<8x16xf32>
    %cst_15 = arith.constant dense<0.000000e+00> : vector<8x64xf32>
    %16 = tpu.matmul %15, %14, %cst_15 {dimension_numbers = #tpu.dot_dimension_numbers<[1], [0], [0], [1], [0, 0, 1, 1], [], []>} : vector<8x16xf32>, vector<16x64xf32>, vector<8x64xf32> -> vector<8x64xf32>
    %17 = arith.subf %16, %6 : vector<8x64xf32>
    %18 = arith.mulf %17, %17 : vector<8x64xf32>
    %c0_16 = arith.constant 0 : index
    %c0_17 = arith.constant 0 : index
    %c0_18 = arith.constant 0 : index
    %19 = vector.load %arg7[%c0_16, %c0_17, %c0_18] : memref<1x8x64xf32, #tpu.memory_space<vmem>>, vector<1x8x64xf32>
    %20 = vector.shape_cast %18 : vector<8x64xf32> to vector<1x8x64xf32>
    %21 = arith.addf %19, %20 : vector<1x8x64xf32>
    %c0_19 = arith.constant 0 : index
    %c0_20 = arith.constant 0 : index
    %c0_21 = arith.constant 0 : index
    %22 = vector.load %arg7[%c0_19, %c0_20, %c0_21] : memref<1x8x64xf32, #tpu.memory_space<vmem>>, vector<1x8x64xf32>
    tpu.vector_store %arg7[%c0_19, %c0_20, %c0_21], %21 {strides = array<i32>} : memref<1x8x64xf32, #tpu.memory_space<vmem>>, vector<1x8x64xf32>,
    return
  }
  func.func @transform_0(%arg0: i32, %arg1: i32) -> (i32, i32, i32) {
    %c0_i32 = arith.constant 0 : i32
    %c0_i32_0 = arith.constant 0 : i32
    return %arg0, %c0_i32, %arg1 : i32, i32, i32
  }
  func.func @transform_1(%arg0: i32, %arg1: i32) -> (i32, i32, i32) {
    %c0_i32 = arith.constant 0 : i32
    %c0_i32_0 = arith.constant 0 : i32
    return %arg0, %c0_i32, %arg1 : i32, i32, i32
  }
  func.func @transform_2(%arg0: i32, %arg1: i32) -> (i32, i32) {
    %c0_i32 = arith.constant 0 : i32
    %c0_i32_0 = arith.constant 0 : i32
    %c0_i32_1 = arith.constant 0 : i32
    return %c0_i32, %c0_i32_0 : i32, i32
  }
  func.func @transform_3(%arg0: i32, %arg1: i32) -> (i32, i32) {
    %c0_i32 = arith.constant 0 : i32
    %c0_i32_0 = arith.constant 0 : i32
    %c0_i32_1 = arith.constant 0 : i32
    return %c0_i32, %c0_i32_0 : i32, i32
  }
  func.func @transform_4(%arg0: i32, %arg1: i32) -> (i32, i32) {
    %c0_i32 = arith.constant 0 : i32
    %c0_i32_0 = arith.constant 0 : i32
    %c0_i32_1 = arith.constant 0 : i32
    return %c0_i32, %c0_i32_0 : i32, i32
  }
  func.func @transform_5(%arg0: i32, %arg1: i32) -> (i32, i32, i32) {
    %c0_i32 = arith.constant 0 : i32
    %c0_i32_0 = arith.constant 0 : i32
    %c0_i32_1 = arith.constant 0 : i32
    return %arg0, %c0_i32, %c0_i32_0 : i32, i32, i32
  }
}

</mosaic_0001>

<llo_original>
// kernel: tpu_custom_call.1
$region0: #{tpu_custom_call.1}
  #allocation0 [shape = 'u32[]', space=smem, size = 0x4, offset = 0x4, fixed_abs, tag = 'smem constant byte address 0x4 - core index']
  #allocation1 [shape = 'u32[144,128]{1,0:T(1,128)}', space=vmem, size = 0x12000, scoped, tag = 'internal scratch']
  %s0 = inlined_call_operand.hbm [shape: f32[2,4,64], index: 0, kind: input, shape index: {}]
  %s1 = inlined_call_operand.vmem [shape: f32[2,8,64], index: 1, kind: input, shape index: {}]
  %s2 = inlined_call_operand.vmem [shape: f32[16,4], index: 2, kind: input, shape index: {}]
  %s3 = inlined_call_operand.hbm [shape: f32[16,16], index: 3, kind: input, shape index: {}]
  %s4 = inlined_call_operand.vmem [shape: f32[8,16], index: 4, kind: input, shape index: {}]
  %s5 = inlined_call_operand.hbm [shape: f32[2,8,64], index: 5, kind: output, shape index: {}]
  %s6 = sld [smem:[#allocation0]]
  $region65: #{tpu_custom_call.1} parent=0
    _
  %s8 = ssub.s32 1, %s6
  %s9 = scalar_select 0, %s8, %s6
  $region1: #{tpu_custom_call.1} parent=0
    #allocation2 [shape = 'u8[4096]{0}', space=vmem, size = 0x1000, scoped, tag = 'input window, operand 0']
    #allocation3 [shape = 's32[2]{0}', space=sflag, size = 0x8, scoped, tag = 'scoped memory for tpu_custom_call.1']
    #allocation4 [shape = 's32[2]{0}', space=sflag, size = 0x8, scoped, tag = 'scoped memory for tpu_custom_call.1']
    #allocation5 [shape = 'u8[8192]{0}', space=vmem, size = 0x2000, scoped, tag = 'input window, operand 3, single buffered']
    #allocation6 [shape = 's32[1]{0}', space=sflag, size = 0x4, scoped, tag = 'scoped memory for tpu_custom_call.1']
    #allocation7 [shape = 'u8[8192]{0}', space=vmem, size = 0x2000, scoped, tag = 'output window, operand 0']
    %10 = vsyncpa [#allocation3], 0
    %s11 = scalar_lea.sflag [#allocation3], 1
    %12 = vsyncpa %s11, 0
    %13 = vsyncpa [#allocation6], 0
    %14 = vsyncpa [#allocation4], 0
    %s15 = scalar_lea.sflag [#allocation4], 1
    %16 = vsyncpa %s15, 0
    loop: start=0, step=1, limit=4
    $region2: #{tpu_custom_call.1} parent=1 // loop_pre_header
      _
    $region3: #{tpu_custom_call.1} parent=1 // loop_header
      %s18 = sphi 0, %s22
      %p19 = scmp.ge.s32.totalorder %s18, 4
      %s25 = sphi 0, %s37
      %s26 = sphi 0, %s33
      %s27 = sphi 0, %s25
      %s28 = sphi 0, %s26
      %s29 = sphi 0, %s27
      %s30 = sphi 0, %s28
      %s42 = sphi 0, %s44
      %s45 = sphi 0, %s42
      %s46 = sphi 0, %s45
      %s62 = sphi 0, %s46
      %s70 = sphi 0, %s72
      %s73 = sphi 0, %s70
      %s74 = sphi 0, %s73
      %s90 = sphi 0, %s74
      %s94 = sphi 0, %s94
      %s96 = sphi 0, %s94
      %s97 = sphi 0, %s96
      %s111 = sphi 0, %s97
      %s115 = sphi 0, %s115
      %s117 = sphi 0, %s115
      %s118 = sphi 0, %s117
      %s132 = sphi 0, %s118
      %s136 = sphi 0, %s136
      %s138 = sphi 0, %s136
      %s139 = sphi 0, %s138
      %s153 = sphi 0, %s139
      %s159 = sphi 0, %s161
      %s162 = sphi 0, %s159
      %s163 = sphi 0, %s162
      %s179 = sphi 0, %s163
    $region4: #{tpu_custom_call.1} parent=1 // loop_header_branch
      %21 = sbr.rel (%p19) target = $region8
    $region5: #{tpu_custom_call.1} parent=1 // loop_body
      %s23 = ssub.s32 %s18, 1
      %s24 = ssub.s32 %s18, 2
      %s31 = sadd.s32 1, %s26
      %p32 = scmp.ge.s32.totalorder %s31, 1
      %s33 = scalar_select %p32, 0, %s31
      %s34 = sadd.s32 1, %s25
      %s35 = scalar_select %p32, %s34, %s25
      %p36 = scmp.ge.s32.totalorder %s35, 2
      %s37 = scalar_select %p36, 0, %s35
      %s38 = ssub.s32 %s25, %s37
      %s39 = ssub.s32 %s26, %s33
      %s40 = sor.u32 %s38, %s39
      %p41 = scmp.eq.s32.totalorder %s40, 0
      %s43 = sadd.s32 %s42, 1
      %s44 = scalar_select %p41, %s42, %s43
      %p47 = pneg %p41
      %p48 = scmp.eq.s32.totalorder %s18, 1
      %p49 = por %p47, %p48
      %p50 = scmp.ne.s32.totalorder %s42, %s45
      %p51 = scmp.eq.s32.totalorder %s18, 0
      %p52 = por %p50, %p51
      %p53 = scmp.ne.s32.totalorder %s42, %s45
      %p54 = scmp.eq.s32.totalorder %s23, 1
      %p55 = por %p53, %p54
      %p56 = scmp.ne.s32.totalorder %s45, %s46
      %p57 = scmp.eq.s32.totalorder %s23, 0
      %p58 = por %p56, %p57
      %p59 = scmp.ne.s32.totalorder %s45, %s46
      %p60 = scmp.eq.s32.totalorder %s24, 1
      %p61 = por %p59, %p60
      %p63 = scmp.ne.s32.totalorder %s46, %s62
      %p64 = scmp.eq.s32.totalorder %s24, 0
      %p65 = por %p63, %p64
      %s66 = ssub.s32 %s25, %s37
      %s67 = ssub.s32 %s26, %s33
      %s68 = sor.u32 %s66, %s67
      %p69 = scmp.eq.s32.totalorder %s68, 0
      %s71 = sadd.s32 %s70, 1
      %s72 = scalar_select %p69, %s70, %s71
      %p75 = pneg %p69
      %p76 = scmp.eq.s32.totalorder %s18, 1
      %p77 = por %p75, %p76
      %p78 = scmp.ne.s32.totalorder %s70, %s73
      %p79 = scmp.eq.s32.totalorder %s18, 0
      %p80 = por %p78, %p79
      %p81 = scmp.ne.s32.totalorder %s70, %s73
      %p82 = scmp.eq.s32.totalorder %s23, 1
      %p83 = por %p81, %p82
      %p84 = scmp.ne.s32.totalorder %s73, %s74
      %p85 = scmp.eq.s32.totalorder %s23, 0
      %p86 = por %p84, %p85
      %p87 = scmp.ne.s32.totalorder %s73, %s74
      %p88 = scmp.eq.s32.totalorder %s24, 1
      %p89 = por %p87, %p88
      %p91 = scmp.ne.s32.totalorder %s74, %s90
      %p92 = scmp.eq.s32.totalorder %s24, 0
      %p93 = por %p91, %p92
      %s95 = sadd.s32 %s94, 1
      %p98 = scmp.eq.s32.totalorder %s18, 1
      %p99 = scmp.ne.s32.totalorder %s94, %s96
      %p100 = scmp.eq.s32.totalorder %s18, 0
      %p101 = por %p99, %p100
      %p102 = scmp.ne.s32.totalorder %s94, %s96
      %p103 = scmp.eq.s32.totalorder %s23, 1
      %p104 = por %p102, %p103
      %p105 = scmp.ne.s32.totalorder %s96, %s97
      %p106 = scmp.eq.s32.totalorder %s23, 0
      %p107 = por %p105, %p106
      %p108 = scmp.ne.s32.totalorder %s96, %s97
      %p109 = scmp.eq.s32.totalorder %s24, 1
      %p110 = por %p108, %p109
      %p112 = scmp.ne.s32.totalorder %s97, %s111
      %p113 = scmp.eq.s32.totalorder %s24, 0
      %p114 = por %p112, %p113
      %s116 = sadd.s32 %s115, 1
      %p119 = scmp.eq.s32.totalorder %s18, 1
      %p120 = scmp.ne.s32.totalorder %s115, %s117
      %p121 = scmp.eq.s32.totalorder %s18, 0
      %p122 = por %p120, %p121
      %p123 = scmp.ne.s32.totalorder %s115, %s117
      %p124 = scmp.eq.s32.totalorder %s23, 1
      %p125 = por %p123, %p124
      %p126 = scmp.ne.s32.totalorder %s117, %s118
      %p127 = scmp.eq.s32.totalorder %s23, 0
      %p128 = por %p126, %p127
      %p129 = scmp.ne.s32.totalorder %s117, %s118
      %p130 = scmp.eq.s32.totalorder %s24, 1
      %p131 = por %p129, %p130
      %p133 = scmp.ne.s32.totalorder %s118, %s132
      %p134 = scmp.eq.s32.totalorder %s24, 0
      %p135 = por %p133, %p134
      %s137 = sadd.s32 %s136, 1
      %p140 = scmp.eq.s32.totalorder %s18, 1
      %p141 = scmp.ne.s32.totalorder %s136, %s138
      %p142 = scmp.eq.s32.totalorder %s18, 0
      %p143 = por %p141, %p142
      %p144 = scmp.ne.s32.totalorder %s136, %s138
      %p145 = scmp.eq.s32.totalorder %s23, 1
      %p146 = por %p144, %p145
      %p147 = scmp.ne.s32.totalorder %s138, %s139
      %p148 = scmp.eq.s32.totalorder %s23, 0
      %p149 = por %p147, %p148
      %p150 = scmp.ne.s32.totalorder %s138, %s139
      %p151 = scmp.eq.s32.totalorder %s24, 1
      %p152 = por %p150, %p151
      %p154 = scmp.ne.s32.totalorder %s139, %s153
      %p155 = scmp.eq.s32.totalorder %s24, 0
      %p156 = por %p154, %p155
      %s157 = ssub.s32 %s25, %s37
      %p158 = scmp.eq.s32.totalorder %s157, 0
      %s160 = sadd.s32 %s159, 1
      %s161 = scalar_select %p158, %s159, %s160
      %p164 = pneg %p158
      %p165 = scmp.eq.s32.totalorder %s18, 1
      %p166 = por %p164, %p165
      %p167 = scmp.ne.s32.totalorder %s159, %s162
      %p168 = scmp.eq.s32.totalorder %s18, 0
      %p169 = por %p167, %p168
      %p170 = scmp.ne.s32.totalorder %s159, %s162
      %p171 = scmp.eq.s32.totalorder %s23, 1
      %p172 = por %p170, %p171
      %p173 = scmp.ne.s32.totalorder %s162, %s163
      %p174 = scmp.eq.s32.totalorder %s23, 0
      %p175 = por %p173, %p174
      %p176 = scmp.ne.s32.totalorder %s162, %s163
      %p177 = scmp.eq.s32.totalorder %s24, 1
      %p178 = por %p176, %p177
      %p180 = scmp.ne.s32.totalorder %s163, %s179
      %p181 = scmp.eq.s32.totalorder %s24, 0
      %p182 = por %p180, %p181
      %p183 = scmp.le.s32.totalorder 1, %s18
      %p184 = scmp.lt.s32.totalorder %s18, 3
      %p185 = pnand %p183, %p184
      %p186 = pneg %p185
      // Predicated region
      $region9: #{tpu_custom_call.1} parent=5 // pred_check
        _
      $region10: #{tpu_custom_call.1} parent=5 // pred_check_branch
        %188 = sbr.rel (%p185) target = $region12
      $region11: #{tpu_custom_call.1} parent=5 // pred_region
        %s189 = ssub.s32 %s18, 1
        // Predicated region
        $region13: #{tpu_custom_call.1} parent=11 // pred_check
          %p190 = pneg %p107
        $region14: #{tpu_custom_call.1} parent=11 // pred_check_branch
          %192 = sbr.rel (%p190) target = $region16
        $region15: #{tpu_custom_call.1} parent=11 // pred_region
          _
        $region16: #{tpu_custom_call.1} parent=11 // pred_fallthru
          _
        // Predicated region
        $region17: #{tpu_custom_call.1} parent=11 // pred_check
          %p193 = pneg %p128
        $region18: #{tpu_custom_call.1} parent=11 // pred_check_branch
          %195 = sbr.rel (%p193) target = $region20
        $region19: #{tpu_custom_call.1} parent=11 // pred_region
          %s197 = ssub.s32 256, 256
          %198 = vsyncadd [#allocation6], %s197
          %s199 = sshll.u32 [#allocation5], 4
          %s200 = int_to_ptr.vmem [resolvable:$true] %s199
          %205 = dma.hbm_to_vmem [thread:$0]  %s3, 256, %s200, [#allocation6], 128, 128, 8
        $region20: #{tpu_custom_call.1} parent=11 // pred_fallthru
          _
        // Predicated region
        $region21: #{tpu_custom_call.1} parent=11 // pred_check
          %p206 = pneg %p149
        $region22: #{tpu_custom_call.1} parent=11 // pred_check_branch
          %208 = sbr.rel (%p206) target = $region24
        $region23: #{tpu_custom_call.1} parent=11 // pred_region
          _
        $region24: #{tpu_custom_call.1} parent=11 // pred_fallthru
          _
      $region12: #{tpu_custom_call.1} parent=5 // pred_fallthru
        _
      %p209 = scmp.lt.s32.totalorder %s18, 2
      // Predicated region
      $region25: #{tpu_custom_call.1} parent=5 // pred_check
        %p210 = pneg %p209
      $region26: #{tpu_custom_call.1} parent=5 // pred_check_branch
        %212 = sbr.rel (%p210) target = $region28
      $region27: #{tpu_custom_call.1} parent=5 // pred_region
        // Predicated region
        $region29: #{tpu_custom_call.1} parent=27 // pred_check
          %p213 = pneg %p52
        $region30: #{tpu_custom_call.1} parent=27 // pred_check_branch
          %215 = sbr.rel (%p213) target = $region32
        $region31: #{tpu_custom_call.1} parent=27 // pred_region
          %s216 = sand.u32 %s42, 1
          %s217 = scalar_lea.sflag [#allocation3], %s216
          %s218 = sand.u32 %s42, 1
          %s219 = smul.addr %s218, 4
          %s220 = scalar_lea.vmem [#allocation2], %s219
          %s222 = ssub.s32 64, 64
          %223 = vsyncadd %s217, %s222
          %s224 = sadd.s32 %s26, %s25
          %s225 = smul.addr %s224, 64
          %s226 = scalar_lea.hbm %s0, %s225
          %s228 = sshll.u32 %s220, 4
          %s229 = int_to_ptr.vmem [resolvable:$true] %s228
          %231 = dma.hbm_to_vmem [thread:$0]  %s226, 64, %s229, %s217
        $region32: #{tpu_custom_call.1} parent=27 // pred_fallthru
          _
        // Predicated region
        $region33: #{tpu_custom_call.1} parent=27 // pred_check
          %p232 = pneg %p80
        $region34: #{tpu_custom_call.1} parent=27 // pred_check_branch
          %234 = sbr.rel (%p232) target = $region36
        $region35: #{tpu_custom_call.1} parent=27 // pred_region
          %p235 = scmp.lt.s32.totalorder %s25, 1
          %s236 = scalar_select %p235, %s25, 1
          %p237 = scmp.lt.s32.totalorder %s26, 0
          %s238 = scalar_select %p237, %s26, 0
          %s239 = sadd.s32 %s238, %s236
          %s240 = smul.addr %s239, 8
          %s241 = scalar_lea.vmem %s1, %s240
        $region36: #{tpu_custom_call.1} parent=27 // pred_fallthru
          _
      $region28: #{tpu_custom_call.1} parent=5 // pred_fallthru
        _
      %p242 = scmp.le.s32.totalorder 1, %s18
      %p243 = scmp.lt.s32.totalorder %s18, 3
      %p244 = pnand %p242, %p243
      %p245 = pneg %p244
      // Predicated region
      $region37: #{tpu_custom_call.1} parent=5 // pred_check
        _
      $region38: #{tpu_custom_call.1} parent=5 // pred_check_branch
        %247 = sbr.rel (%p244) target = $region40
      $region39: #{tpu_custom_call.1} parent=5 // pred_region
        %s248 = ssub.s32 %s18, 1
        %s249 = sand.u32 %s45, 1
        %s250 = scalar_lea.sflag [#allocation3], %s249
        %s251 = sand.u32 %s45, 1
        %s252 = smul.addr %s251, 4
        %s253 = scalar_lea.vmem [#allocation2], %s252
        // Predicated region
        $region41: #{tpu_custom_call.1} parent=39 // pred_check
          %p254 = pneg %p58
        $region42: #{tpu_custom_call.1} parent=39 // pred_check_branch
          %256 = sbr.rel (%p254) target = $region44
        $region43: #{tpu_custom_call.1} parent=39 // pred_region
          %257 = dma.done %s250, 64
        $region44: #{tpu_custom_call.1} parent=39 // pred_fallthru
          _
        // Predicated region
        $region45: #{tpu_custom_call.1} parent=39 // pred_check
          %p258 = pneg %p128
        $region46: #{tpu_custom_call.1} parent=39 // pred_check_branch
          %260 = sbr.rel (%p258) target = $region48
        $region47: #{tpu_custom_call.1} parent=39 // pred_region
          %261 = dma.done [#allocation6], 256
        $region48: #{tpu_custom_call.1} parent=39 // pred_fallthru
          _
        %s262 = sand.u32 %s45, 1
        %s263 = scalar_lea.sflag [#allocation3], %s262
        %s264 = sand.u32 %s45, 1
        %s265 = smul.addr %s264, 4
        %s266 = scalar_lea.vmem [#allocation2], %s265
        %p267 = pneg %p58
        %p268 = pneg %p55
        %p269 = scmp.lt.s32.totalorder %s27, 1
        %s270 = scalar_select %p269, %s27, 1
        %p271 = scmp.lt.s32.totalorder %s28, 0
        %s272 = scalar_select %p271, %s28, 0
        %s273 = sadd.s32 %s272, %s270
        %s274 = smul.addr %s273, 8
        %s275 = scalar_lea.vmem %s1, %s274
        %p276 = pneg %p86
        %p277 = pneg %p83
        %p278 = pneg %p107
        %p279 = pneg %p104
        %p280 = pneg %p128
        %p281 = pneg %p125
        %p282 = pneg %p149
        %p283 = pneg %p146
        %p284 = pneg %p175
        %p285 = pneg %p172
        %s286 = sand.u32 %s162, 1
        %s287 = scalar_lea.sflag [#allocation4], %s286
        %s288 = sand.u32 %s162, 1
        %s289 = smul.addr %s288, 8
        %s290 = scalar_lea.vmem [#allocation7], %s289
        %p291 = scmp.lt.s32.totalorder %s27, 1
        %s292 = scalar_select %p291, %s27, 1
        %p293 = scmp.lt.s32.totalorder %s28, 0
        %s294 = scalar_select %p293, %s28, 0
        %s295 = sadd.s32 %s294, %s292
        %s296 = smul.addr %s295, 8
        %s297 = scalar_lea.vmem %s1, %s296
        %p298 = scmp.eq.s32.totalorder %s28, 0
        // Predicated region
        $region49: #{tpu_custom_call.1} parent=39 // pred_check
          %p299 = pneg %p298
        $region50: #{tpu_custom_call.1} parent=39 // pred_check_branch
          %301 = sbr.rel (%p299) target = $region52
        $region51: #{tpu_custom_call.1} parent=39 // pred_region
          %vm302 = vcmask 523264
          %303 = vst.msk [vmem:[%s290] sm:$0xff] %vm302, 0.0
        $region52: #{tpu_custom_call.1} parent=39 // pred_fallthru
          _
        %v304 = vld [vmem:[%s253] sm:$0xf]
        %v305 = vld [vmem:[%s297] sm:$0xff]
        %v306 = vld [vmem:[%s2] sm:$0xff]
        %v307 = vld [vmem:[%s2 + $0x8] sm:$0xff]
        %vm308 = vcmask 31744
        %v310 = vsel %vm308, %v306, 0
        %v313 = vsel %vm308, %v307, 0
        %vm315 = vcmask 1043456
        %v317 = vsel %vm315, %v304, 0
        %319 = vmatprep.subr.mxu0 0.0
        %320 = vmatpush1.msra.mxu0 %v317
        %321 = vmatprep.subr.mxu0 0.0
        %322 = vmatpush1.msra.mxu0 0.0
        %323 = vmatprep.subr.mxu0 0.0
        %324 = vmatpush1.msra.mxu0 0.0
        %325 = vmatprep.subr.mxu0 0.0
        %326 = vmatpush1.msra.mxu0 0.0
        %327 = vmatprep.subr.mxu0 0.0
        %328 = vmatpush1.msra.mxu0 0.0
        %329 = vmatprep.subr.mxu0 0.0
        %330 = vmatpush1.msra.mxu0 0.0
        %331 = vmatprep.subr.mxu0 0.0
        %332 = vmatpush1.msra.mxu0 0.0
        %333 = vmatprep.subr.mxu0 0.0
        %334 = vmatpush1.msra.mxu0 0.0
        %335 = vmatprep.subr.mxu0 0.0
        %336 = vmatpush1.msra.mxu0 0.0
        %337 = vmatprep.subr.mxu0 0.0
        %338 = vmatpush1.msra.mxu0 0.0
        %339 = vmatprep.subr.mxu0 0.0
        %340 = vmatpush1.msra.mxu0 0.0
        %341 = vmatprep.subr.mxu0 0.0
        %342 = vmatpush1.msra.mxu0 0.0
        %343 = vmatprep.subr.mxu0 0.0
        %344 = vmatpush1.msra.mxu0 0.0
        %345 = vmatprep.subr.mxu0 0.0
        %346 = vmatpush1.msra.mxu0 0.0
        %347 = vmatprep.subr.mxu0 0.0
        %348 = vmatpush1.msra.mxu0 0.0
        %349 = vmatprep.subr.mxu0 0.0
        %350 = vmatpush1.msra.mxu0 0.0
        %351 = vmatprep.subr.mxu0 0.0
        %352 = vmatpush1.msra.mxu0 0.0
        %353 = vmatprep.subr.mxu0 0.0
        %354 = vmatpush1.msra.mxu0 0.0
        %355 = vmatprep.subr.mxu0 0.0
        %356 = vmatpush1.msra.mxu0 0.0
        %357 = vmatprep.subr.mxu0 0.0
        %358 = vmatpush1.msra.mxu0 0.0
        %359 = vmatprep.subr.mxu0 0.0
        %360 = vmatpush1.msra.mxu0 0.0
        %361 = vmatprep.subr.mxu0 0.0
        %362 = vmatpush1.msra.mxu0 0.0
        %363 = vmatprep.subr.mxu0 0.0
        %364 = vmatpush1.msra.mxu0 0.0
        %365 = vmatprep.subr.mxu0 0.0
        %366 = vmatpush1.msra.mxu0 0.0
        %367 = vmatprep.subr.mxu0 0.0
        %368 = vmatpush1.msra.mxu0 0.0
        %369 = vmatprep.subr.mxu0 0.0
        %370 = vmatpush1.msra.mxu0 0.0
        %371 = vmatprep.subr.mxu0 0.0
        %372 = vmatpush1.msra.mxu0 0.0
        %373 = vmatprep.subr.mxu0 0.0
        %374 = vmatpush1.msra.mxu0 0.0
        %375 = vmatprep.subr.mxu0 0.0
        %376 = vmatpush1.msra.mxu0 0.0
        %377 = vmatprep.subr.mxu0 0.0
        %378 = vmatpush1.msra.mxu0 0.0
        %379 = vmatprep.subr.mxu0 0.0
        %380 = vmatpush1.msra.mxu0 0.0
        %381 = vmatprep.subr.mxu0 0.0
        %382 = vmatpush1.msra.mxu0 0.0
        %383 = vmatprep.mubr.f32.mxu0 0.0
        %384 = vmatmul.mubr.f32.gmra.mrb[0].mxu0 %v310
        %v385 = vpop.f32.mrb[0].mxu0
        %v386 = vadd.f32 0.0, %v385
        %v387 = vpop.f32.mrb[0].mxu0
        %388 = vmatprep.mubr.f32.mxu0 0.0
        %389 = vmatmul.mubr.f32.gmra.mrb[0].mxu0 %v313
        %v390 = vpop.f32.mrb[0].mxu0
        %v391 = vadd.f32 0.0, %v390
        %v392 = vpop.f32.mrb[0].mxu0
        %393 = vdwg.mxu0
        %v394 = vmax.f32 %v386, 0.0
        %v395 = vmax.f32 %v391, 0.0
        %v396 = vld [vmem:[#allocation5] sm:$0xff]
        %v397 = vld [vmem:[#allocation5 + $0x8] sm:$0xff]
        %vm398 = vcmask 130048
        %v400 = vsel %vm398, %v396, 0
        %v403 = vsel %vm398, %v397, 0
        %405 = vmatprep.subr.mxu0 0.0
        %406 = vmatpush1.msra.mxu0 %v394
        %407 = vmatprep.subr.mxu0 0.0
        %408 = vmatpush1.msra.mxu0 %v395
        %409 = vmatprep.subr.mxu0 0.0
        %410 = vmatpush1.msra.mxu0 0.0
        %411 = vmatprep.subr.mxu0 0.0
        %412 = vmatpush1.msra.mxu0 0.0
        %413 = vmatprep.subr.mxu0 0.0
        %414 = vmatpush1.msra.mxu0 0.0
        %415 = vmatprep.subr.mxu0 0.0
        %416 = vmatpush1.msra.mxu0 0.0
        %417 = vmatprep.subr.mxu0 0.0
        %418 = vmatpush1.msra.mxu0 0.0
        %419 = vmatprep.subr.mxu0 0.0
        %420 = vmatpush1.msra.mxu0 0.0
        %421 = vmatprep.subr.mxu0 0.0
        %422 = vmatpush1.msra.mxu0 0.0
        %423 = vmatprep.subr.mxu0 0.0
        %424 = vmatpush1.msra.mxu0 0.0
        %425 = vmatprep.subr.mxu0 0.0
        %426 = vmatpush1.msra.mxu0 0.0
        %427 = vmatprep.subr.mxu0 0.0
        %428 = vmatpush1.msra.mxu0 0.0
        %429 = vmatprep.subr.mxu0 0.0
        %430 = vmatpush1.msra.mxu0 0.0
        %431 = vmatprep.subr.mxu0 0.0
        %432 = vmatpush1.msra.mxu0 0.0
        %433 = vmatprep.subr.mxu0 0.0
        %434 = vmatpush1.msra.mxu0 0.0
        %435 = vmatprep.subr.mxu0 0.0
        %436 = vmatpush1.msra.mxu0 0.0
        %437 = vmatprep.subr.mxu0 0.0
        %438 = vmatpush1.msra.mxu0 0.0
        %439 = vmatprep.subr.mxu0 0.0
        %440 = vmatpush1.msra.mxu0 0.0
        %441 = vmatprep.subr.mxu0 0.0
        %442 = vmatpush1.msra.mxu0 0.0
        %443 = vmatprep.subr.mxu0 0.0
        %444 = vmatpush1.msra.mxu0 0.0
        %445 = vmatprep.subr.mxu0 0.0
        %446 = vmatpush1.msra.mxu0 0.0
        %447 = vmatprep.subr.mxu0 0.0
        %448 = vmatpush1.msra.mxu0 0.0
        %449 = vmatprep.subr.mxu0 0.0
        %450 = vmatpush1.msra.mxu0 0.0
        %451 = vmatprep.subr.mxu0 0.0
        %452 = vmatpush1.msra.mxu0 0.0
        %453 = vmatprep.subr.mxu0 0.0
        %454 = vmatpush1.msra.mxu0 0.0
        %455 = vmatprep.subr.mxu0 0.0
        %456 = vmatpush1.msra.mxu0 0.0
        %457 = vmatprep.subr.mxu0 0.0
        %458 = vmatpush1.msra.mxu0 0.0
        %459 = vmatprep.subr.mxu0 0.0
        %460 = vmatpush1.msra.mxu0 0.0
        %461 = vmatprep.subr.mxu0 0.0
        %462 = vmatpush1.msra.mxu0 0.0
        %463 = vmatprep.subr.mxu0 0.0
        %464 = vmatpush1.msra.mxu0 0.0
        %465 = vmatprep.subr.mxu0 0.0
        %466 = vmatpush1.msra.mxu0 0.0
        %467 = vmatprep.subr.mxu0 0.0
        %468 = vmatpush1.msra.mxu0 0.0
        %469 = vmatprep.mubr.f32.mxu0 0.0
        %470 = vmatmul.mubr.f32.gmra.mrb[0].mxu0 %v400
        %v471 = vpop.f32.mrb[0].mxu0
        %v472 = vadd.f32 0.0, %v471
        %v473 = vpop.f32.mrb[0].mxu0
        %474 = vmatprep.mubr.f32.mxu0 0.0
        %475 = vmatmul.mubr.f32.gmra.mrb[0].mxu0 %v403
        %v476 = vpop.f32.mrb[0].mxu0
        %v477 = vadd.f32 0.0, %v476
        %v478 = vpop.f32.mrb[0].mxu0
        %479 = vdwg.mxu0
        %v480 = vmax.f32 %v472, 0.0
        %v481 = vmax.f32 %v477, 0.0
        %v482 = vld [vmem:[%s4] sm:$0xff]
        %v484 = vsel %vm398, %v482, 0
        %486 = vmatprep.subr.mxu0 0.0
        %487 = vmatpush1.msra.mxu0 %v480
        %488 = vmatprep.subr.mxu0 0.0
        %489 = vmatpush1.msra.mxu0 %v481
        %490 = vmatprep.subr.mxu0 0.0
        %491 = vmatpush1.msra.mxu0 0.0
        %492 = vmatprep.subr.mxu0 0.0
        %493 = vmatpush1.msra.mxu0 0.0
        %494 = vmatprep.subr.mxu0 0.0
        %495 = vmatpush1.msra.mxu0 0.0
        %496 = vmatprep.subr.mxu0 0.0
        %497 = vmatpush1.msra.mxu0 0.0
        %498 = vmatprep.subr.mxu0 0.0
        %499 = vmatpush1.msra.mxu0 0.0
        %500 = vmatprep.subr.mxu0 0.0
        %501 = vmatpush1.msra.mxu0 0.0
        %502 = vmatprep.subr.mxu0 0.0
        %503 = vmatpush1.msra.mxu0 0.0
        %504 = vmatprep.subr.mxu0 0.0
        %505 = vmatpush1.msra.mxu0 0.0
        %506 = vmatprep.subr.mxu0 0.0
        %507 = vmatpush1.msra.mxu0 0.0
        %508 = vmatprep.subr.mxu0 0.0
        %509 = vmatpush1.msra.mxu0 0.0
        %510 = vmatprep.subr.mxu0 0.0
        %511 = vmatpush1.msra.mxu0 0.0
        %512 = vmatprep.subr.mxu0 0.0
        %513 = vmatpush1.msra.mxu0 0.0
        %514 = vmatprep.subr.mxu0 0.0
        %515 = vmatpush1.msra.mxu0 0.0
        %516 = vmatprep.subr.mxu0 0.0
        %517 = vmatpush1.msra.mxu0 0.0
        %518 = vmatprep.subr.mxu0 0.0
        %519 = vmatpush1.msra.mxu0 0.0
        %520 = vmatprep.subr.mxu0 0.0
        %521 = vmatpush1.msra.mxu0 0.0
        %522 = vmatprep.subr.mxu0 0.0
        %523 = vmatpush1.msra.mxu0 0.0
        %524 = vmatprep.subr.mxu0 0.0
        %525 = vmatpush1.msra.mxu0 0.0
        %526 = vmatprep.subr.mxu0 0.0
        %527 = vmatpush1.msra.mxu0 0.0
        %528 = vmatprep.subr.mxu0 0.0
        %529 = vmatpush1.msra.mxu0 0.0
        %530 = vmatprep.subr.mxu0 0.0
        %531 = vmatpush1.msra.mxu0 0.0
        %532 = vmatprep.subr.mxu0 0.0
        %533 = vmatpush1.msra.mxu0 0.0
        %534 = vmatprep.subr.mxu0 0.0
        %535 = vmatpush1.msra.mxu0 0.0
        %536 = vmatprep.subr.mxu0 0.0
        %537 = vmatpush1.msra.mxu0 0.0
        %538 = vmatprep.subr.mxu0 0.0
        %539 = vmatpush1.msra.mxu0 0.0
        %540 = vmatprep.subr.mxu0 0.0
        %541 = vmatpush1.msra.mxu0 0.0
        %542 = vmatprep.subr.mxu0 0.0
        %543 = vmatpush1.msra.mxu0 0.0
        %544 = vmatprep.subr.mxu0 0.0
        %545 = vmatpush1.msra.mxu0 0.0
        %546 = vmatprep.subr.mxu0 0.0
        %547 = vmatpush1.msra.mxu0 0.0
        %548 = vmatprep.subr.mxu0 0.0
        %549 = vmatpush1.msra.mxu0 0.0
        %550 = vmatprep.mubr.f32.mxu0 0.0
        %551 = vmatmul.mubr.f32.gmra.mrb[0].mxu0 %v484
        %v552 = vpop.f32.mrb[0].mxu0
        %v553 = vadd.f32 0.0, %v552
        %v554 = vpop.f32.mrb[0].mxu0
        %555 = vdwg.mxu0
        %v556 = vsub.f32 %v553, %v305
        %v557 = vmul.f32 %v556, %v556
        %v558 = vld [vmem:[%s290] sm:$0xff]
        %v559 = vadd.f32 %v558, %v557
        %vm560 = vcmask 523264
        %561 = vst.msk [vmem:[%s290] sm:$0xff] %vm560, %v559
        %s562 = sand.u32 %s162, 1
        %s563 = scalar_lea.sflag [#allocation4], %s562
        %s564 = sand.u32 %s162, 1
        %s565 = smul.addr %s564, 8
        %s566 = scalar_lea.vmem [#allocation7], %s565
        // Predicated region
        $region53: #{tpu_custom_call.1} parent=39 // pred_check
          %p567 = pneg %p172
        $region54: #{tpu_custom_call.1} parent=39 // pred_check_branch
          %569 = sbr.rel (%p567) target = $region56
        $region55: #{tpu_custom_call.1} parent=39 // pred_region
          %s571 = ssub.s32 128, 128
          %572 = vsyncadd %s563, %s571
          %s573 = smul.addr %s27, 128
          %s574 = scalar_lea.hbm %s5, %s573
          %s576 = sshll.u32 %s566, 4
          %s577 = int_to_ptr.vmem [resolvable:$true] %s576
          %579 = dma.vmem_to_hbm [thread:$0]  %s577, 128, %s574, %s563
        $region56: #{tpu_custom_call.1} parent=39 // pred_fallthru
          _
      $region40: #{tpu_custom_call.1} parent=5 // pred_fallthru
        _
      %p580 = scmp.le.s32.totalorder 2, %s18
      // Predicated region
      $region57: #{tpu_custom_call.1} parent=5 // pred_check
        %p581 = pneg %p580
      $region58: #{tpu_custom_call.1} parent=5 // pred_check_branch
        %583 = sbr.rel (%p581) target = $region60
      $region59: #{tpu_custom_call.1} parent=5 // pred_region
        %s584 = ssub.s32 %s18, 2
        // Predicated region
        $region61: #{tpu_custom_call.1} parent=59 // pred_check
          %p585 = pneg %p178
        $region62: #{tpu_custom_call.1} parent=59 // pred_check_branch
          %587 = sbr.rel (%p585) target = $region64
        $region63: #{tpu_custom_call.1} parent=59 // pred_region
          %s588 = sand.u32 %s163, 1
          %s589 = scalar_lea.sflag [#allocation4], %s588
          %s590 = sand.u32 %s163, 1
          %s591 = smul.addr %s590, 8
          %s592 = scalar_lea.vmem [#allocation7], %s591
          %593 = dma.done %s589, 128
        $region64: #{tpu_custom_call.1} parent=59 // pred_fallthru
          _
      $region60: #{tpu_custom_call.1} parent=5 // pred_fallthru
        _
    $region6: #{tpu_custom_call.1} parent=1 // loop_footer
      %s22 = sadd.s32 1, %s18
    $region7: #{tpu_custom_call.1} parent=1 // loop_footer_branch
      %17 = sbr.rel target = $region3
    $region8: #{tpu_custom_call.1} parent=1 // loop_exit
      _
    %594 = vsyncpa [#allocation3], 1
    %s595 = scalar_lea.sflag [#allocation3], 1
    %596 = vsyncpa %s595, 1
    %597 = vsyncpa [#allocation6], 1
    %598 = vsyncpa [#allocation4], 1
    %s599 = scalar_lea.sflag [#allocation4], 1
    %600 = vsyncpa %s599, 1

</llo_original>
